<compile_context>
chip_gen: v7x
topology: tpu7x:2x2x1
jax: 0.10.0
libtpu: 0.0.40
codegen_flags: <defaults>
</compile_context>

<pallas_src>
import functools

import jax
import jax.numpy as jnp
import numpy as np
from jax.experimental import pallas as pl
from jax.experimental.pallas import tpu as pltpu


def _layer_norm_kernel(x_ref, w_ref, b_ref, o_ref, *, eps, inv_c):
    """Normalize each lane-column of a (C, TN) tile over the channel axis."""
    x = x_ref[...].astype(jnp.float32)                       # (C, TN)

    # One-pass stats over the channel (sublane) axis: one XLU reduce pair
    # instead of two full passes (mean, then centered variance).
    s1 = jnp.sum(x, axis=0, keepdims=True)                   # (1, TN)
    s2 = jnp.sum(x * x, axis=0, keepdims=True)               # (1, TN)
    mean = s1 * inv_c
    var = jnp.maximum(s2 * inv_c - mean * mean, 0.0)         # guard tiny negatives

    # rsqrt -> EUP slot; no VALU divide on the critical path.
    inv = jax.lax.rsqrt(var + eps)

    y = (x - mean) * inv                                     # (C, TN)
    o_ref[...] = (w_ref[...] * y + b_ref[...]).astype(o_ref.dtype)


def _pick_lane_tile(c, n_pad, vmem_budget_bytes=16 * 1024 * 1024):
    """Largest 128-multiple lane tile that (a) fits a conservative VMEM budget
    (in + out tiles, double-buffered, f32) and (b) keeps >= 4 grid steps so the
    BlockSpec pipeline has depth and both v7x cores get work."""
    max_tile = max(128, (vmem_budget_bytes // (c * 4 * 4)) // 128 * 128)
    candidates = [t for t in (2048, 1024, 512, 256, 128) if t <= max_tile]
    for tile in candidates:
        if n_pad % tile == 0 and n_pad // tile >= 4:
            return tile
    for tile in candidates:
        if n_pad % tile == 0:
            return tile
    return 128


def _layer_norm_slab(x_cn, weight, bias, eps):
    """LayerNorm over axis 0 of a (C, N) slab (each column normalized over C)."""
    c, n = x_cn.shape
    n_pad = -(-n // 128) * 128
    tile = _pick_lane_tile(c, n_pad)
    if n_pad != n:
        # Padded (all-zero) columns are independent of real columns and are
        # sliced off below; with eps > 0 they produce finite garbage, no NaNs.
        x_cn = jnp.pad(x_cn, ((0, 0), (0, n_pad - n)))

    w2 = weight.reshape(c, 1).astype(jnp.float32)
    b2 = bias.reshape(c, 1).astype(jnp.float32)

    kernel = functools.partial(_layer_norm_kernel, eps=float(eps), inv_c=1.0 / c)

    itemsize = jnp.dtype(x_cn.dtype).itemsize
    cost = pl.CostEstimate(
        flops=int(10 * c * n_pad),                 # ~mul/add per element + stats
        transcendentals=int(n_pad),                # one rsqrt per column
        bytes_accessed=int(2 * c * n_pad * itemsize + 2 * c * 4),
    )

    grid_spec = pltpu.PrefetchScalarGridSpec(
        num_scalar_prefetch=0,
        grid=(n_pad // tile,),
        in_specs=[
            pl.BlockSpec((c, tile), lambda i: (0, i)),   # x tile (lane-dense)
            pl.BlockSpec((c, 1), lambda i: (0, 0)),      # weight (resident)
            pl.BlockSpec((c, 1), lambda i: (0, 0)),      # bias   (resident)
        ],
        out_specs=pl.BlockSpec((c, tile), lambda i: (0, i)),
    )

    out = pl.pallas_call(
        kernel,
        out_shape=jax.ShapeDtypeStruct((c, n_pad), x_cn.dtype),
        grid_spec=grid_spec,
        compiler_params=pltpu.CompilerParams(dimension_semantics=("parallel",)),
        cost_estimate=cost,
    )(x_cn, w2, b2)

    return out[:, :n] if n_pad != n else out


def layer_norm(x, weight, bias, *, eps=1e-6, data_format="channels_last"):
    """Pallas equivalent of the PyTorch LayerNorm module's forward."""
    if data_format not in ("channels_last", "channels_first"):
        raise NotImplementedError(data_format)

    if data_format == "channels_last":
        # (..., C): normalize over the last axis.  Rearrange so C is on the
        # sublane axis and everything else is flattened onto dense lanes.
        c = x.shape[-1]
        lead_shape = x.shape[:-1]
        x_cn = x.reshape(-1, c).T                            # (C, N)
        out_cn = _layer_norm_slab(x_cn, weight, bias, eps)   # (C, N)
        return out_cn.T.reshape(*lead_shape, c)
    else:
        # channels_first: (B, C, *spatial), normalize over axis 1.
        c = x.shape[1]
        x_cn = jnp.moveaxis(x, 1, 0).reshape(c, -1)          # (C, B*prod(spatial))
        out_cn = _layer_norm_slab(x_cn, weight, bias, eps)
        out = out_cn.reshape((c,) + x.shape[0:1] + x.shape[2:])
        return jnp.moveaxis(out, 0, 1)


def ref_layer_norm(x, weight, bias, *, eps=1e-6, data_format="channels_last"):
    """Pure-JAX reference mirroring the PyTorch module exactly (two-pass, /sqrt)."""
    if data_format == "channels_last":
        u = x.mean(-1, keepdims=True)
        s = ((x - u) ** 2).mean(-1, keepdims=True)
        xn = (x - u) / jnp.sqrt(s + eps)
        return xn * weight + bias
    else:
        u = x.mean(1, keepdims=True)
        s = ((x - u) ** 2).mean(1, keepdims=True)
        xn = (x - u) / jnp.sqrt(s + eps)
        bshape = (1, -1) + (1,) * (x.ndim - 2)
        return weight.reshape(bshape) * xn + bias.reshape(bshape)


if __name__ == "__main__":
    B, C, H, W = 2, 4, 16, 16
    eps = 1e-6

    key = jax.random.PRNGKey(0)
    kx, kw, kb = jax.random.split(key, 3)
    weight = 1.0 + 0.1 * jax.random.normal(kw, (C,), jnp.float32)
    bias = 0.1 * jax.random.normal(kb, (C,), jnp.float32)

    # channels_first: x is (B, C, H, W), normalized over the channel axis.
    x_cf = jax.random.normal(kx, (B, C, H, W), jnp.float32)
    out_cf = jax.block_until_ready(
        layer_norm(x_cf, weight, bias, eps=eps, data_format="channels_first"))
    ref_cf = ref_layer_norm(x_cf, weight, bias, eps=eps, data_format="channels_first")
    np.testing.assert_allclose(np.asarray(out_cf), np.asarray(ref_cf),
                               rtol=1e-5, atol=1e-5)

    # channels_last: x is (B, H, W, C), normalized over the last axis.
    x_cl = jnp.transpose(x_cf, (0, 2, 3, 1))
    out_cl = jax.block_until_ready(
        layer_norm(x_cl, weight, bias, eps=eps, data_format="channels_last"))
    ref_cl = ref_layer_norm(x_cl, weight, bias, eps=eps, data_format="channels_last")
    np.testing.assert_allclose(np.asarray(out_cl), np.asarray(ref_cl),
                               rtol=1e-5, atol=1e-5)

    print("KERNEL_OK")
</pallas_src>

<mosaic_0001>
module attributes {stable_mosaic.version = 11 : i64} {
  func.func @_layer_norm_kernel(%arg0: i32, %arg1: memref<4x128xf32, #tpu.memory_space<vmem>>, %arg2: memref<4x1xf32, #tpu.memory_space<vmem>>, %arg3: memref<4x1xf32, #tpu.memory_space<vmem>>, %arg4: memref<4x128xf32, #tpu.memory_space<vmem>>) attributes {dimension_semantics = [#tpu.dimension_semantics<parallel>], iteration_bounds = array<i64: 4>, scalar_prefetch = 0 : i64, scratch_operands = 0 : i64, tpu.core_type = #tpu.core_type<tc>, window_params = [{transform_indices = @transform_0, window_bounds = array<i64: 4, 128>}, {pipeline_mode = #tpu.pipeline_mode<synchronous>, transform_indices = @transform_1, window_bounds = array<i64: 4, 1>}, {pipeline_mode = #tpu.pipeline_mode<synchronous>, transform_indices = @transform_2, window_bounds = array<i64: 4, 1>}, {transform_indices = @transform_3, window_bounds = array<i64: 4, 128>}]} {
    %c0 = arith.constant 0 : index
    %c0_0 = arith.constant 0 : index
    %0 = vector.load %arg1[%c0, %c0_0] : memref<4x128xf32, #tpu.memory_space<vmem>>, vector<4x128xf32>
    %cst = arith.constant dense<0.000000e+00> : vector<128xf32>
    %1 = vector.multi_reduction <add>, %0, %cst [0] : vector<4x128xf32> to vector<128xf32>
    %2 = vector.shape_cast %1 : vector<128xf32> to vector<1x128xf32>
    %3 = arith.mulf %0, %0 : vector<4x128xf32>
    %cst_1 = arith.constant dense<0.000000e+00> : vector<128xf32>
    %4 = vector.multi_reduction <add>, %3, %cst_1 [0] : vector<4x128xf32> to vector<128xf32>
    %5 = vector.shape_cast %4 : vector<128xf32> to vector<1x128xf32>
    %cst_2 = arith.constant 2.500000e-01 : f32
    %6 = vector.broadcast %cst_2 : f32 to vector<1x128xf32>
    %7 = arith.mulf %2, %6 : vector<1x128xf32>
    %cst_3 = arith.constant 2.500000e-01 : f32
    %8 = vector.broadcast %cst_3 : f32 to vector<1x128xf32>
    %9 = arith.mulf %5, %8 : vector<1x128xf32>
    %10 = arith.mulf %7, %7 : vector<1x128xf32>
    %11 = arith.subf %9, %10 : vector<1x128xf32>
    %cst_4 = arith.constant 0.000000e+00 : f32
    %12 = vector.broadcast %cst_4 : f32 to vector<1x128xf32>
    %13 = arith.maximumf %11, %12 : vector<1x128xf32>
    %cst_5 = arith.constant 9.99999997E-7 : f32
    %14 = vector.broadcast %cst_5 : f32 to vector<1x128xf32>
    %15 = arith.addf %13, %14 : vector<1x128xf32>
    %16 = math.rsqrt %15 : vector<1x128xf32>
    %17 = vector.broadcast %7 : vector<1x128xf32> to vector<4x128xf32>
    %18 = arith.subf %0, %17 : vector<4x128xf32>
    %19 = vector.broadcast %16 : vector<1x128xf32> to vector<4x128xf32>
    %20 = arith.mulf %18, %19 : vector<4x128xf32>
    %c0_6 = arith.constant 0 : index
    %c0_7 = arith.constant 0 : index
    %21 = vector.load %arg2[%c0_6, %c0_7] : memref<4x1xf32, #tpu.memory_space<vmem>>, vector<4x1xf32>
    %22 = vector.broadcast %21 : vector<4x1xf32> to vector<4x128xf32>
    %23 = arith.mulf %22, %20 : vector<4x128xf32>
    %c0_8 = arith.constant 0 : index
    %c0_9 = arith.constant 0 : index
    %24 = vector.load %arg3[%c0_8, %c0_9] : memref<4x1xf32, #tpu.memory_space<vmem>>, vector<4x1xf32>
    %25 = vector.broadcast %24 : vector<4x1xf32> to vector<4x128xf32>
    %26 = arith.addf %23, %25 : vector<4x128xf32>
    %c0_10 = arith.constant 0 : index
    %c0_11 = arith.constant 0 : index
    %27 = vector.load %arg4[%c0_10, %c0_11] : memref<4x128xf32, #tpu.memory_space<vmem>>, vector<4x128xf32>
    tpu.vector_store %arg4[%c0_10, %c0_11], %26 {strides = array<i32>} : memref<4x128xf32, #tpu.memory_space<vmem>>, vector<4x128xf32>,
    return
  }
  func.func @transform_0(%arg0: i32) -> (i32, i32) {
    %c0_i32 = arith.constant 0 : i32
    %c0_i32_0 = arith.constant 0 : i32
    return %c0_i32, %arg0 : i32, i32
  }
  func.func @transform_1(%arg0: i32) -> (i32, i32) {
    %c0_i32 = arith.constant 0 : i32
    %c0_i32_0 = arith.constant 0 : i32
    %c0_i32_1 = arith.constant 0 : i32
    return %c0_i32, %c0_i32_0 : i32, i32
  }
  func.func @transform_2(%arg0: i32) -> (i32, i32) {
    %c0_i32 = arith.constant 0 : i32
    %c0_i32_0 = arith.constant 0 : i32
    %c0_i32_1 = arith.constant 0 : i32
    return %c0_i32, %c0_i32_0 : i32, i32
  }
  func.func @transform_3(%arg0: i32) -> (i32, i32) {
    %c0_i32 = arith.constant 0 : i32
    %c0_i32_0 = arith.constant 0 : i32
    return %c0_i32, %arg0 : i32, i32
  }
}

</mosaic_0001>

<llo_original>
// kernel: tpu_custom_call.1
$region0: #{tpu_custom_call.1}
  #allocation0 [shape = 'u32[]', space=smem, size = 0x4, offset = 0x4, fixed_abs, tag = 'smem constant byte address 0x4 - core index']
  #allocation1 [shape = 'u32[144,128]{1,0:T(1,128)}', space=vmem, size = 0x12000, scoped, tag = 'internal scratch']
  %s0 = inlined_call_operand.hbm [shape: f32[4,512], index: 0, kind: input, shape index: {}]
  %s1 = inlined_call_operand.vmem [shape: f32[4,1], index: 1, kind: input, shape index: {}]
  %s2 = inlined_call_operand.vmem [shape: f32[4,1], index: 2, kind: input, shape index: {}]
  %s3 = inlined_call_operand.hbm [shape: f32[4,512], index: 3, kind: output, shape index: {}]
  %s4 = sld [smem:[#allocation0]]
  $region49: #{tpu_custom_call.1} parent=0
    _
  %s6 = ssub.s32 1, %s4
  %s7 = scalar_select 0, %s6, %s4
  $region1: #{tpu_custom_call.1} parent=0
    #allocation2 [shape = 'u8[4096]{0}', space=vmem, size = 0x1000, scoped, tag = 'input window, operand 0']
    #allocation3 [shape = 's32[2]{0}', space=sflag, size = 0x8, scoped, tag = 'scoped memory for tpu_custom_call.1']
    #allocation4 [shape = 's32[2]{0}', space=sflag, size = 0x8, scoped, tag = 'scoped memory for tpu_custom_call.1']
    #allocation5 [shape = 'u8[4096]{0}', space=vmem, size = 0x1000, scoped, tag = 'output window, operand 0']
    %8 = vsyncpa [#allocation3], 0
    %s9 = scalar_lea.sflag [#allocation3], 1
    %10 = vsyncpa %s9, 0
    %11 = vsyncpa [#allocation4], 0
    %s12 = scalar_lea.sflag [#allocation4], 1
    %13 = vsyncpa %s12, 0
    loop: start=0, step=1, limit=6
    $region2: #{tpu_custom_call.1} parent=1 // loop_pre_header
      _
    $region3: #{tpu_custom_call.1} parent=1 // loop_header
      %s15 = sphi 0, %s19
      %p16 = scmp.ge.s32.totalorder %s15, 6
      %s25 = sphi 0, %s27
      %s28 = sphi 0, %s25
      %s29 = sphi 0, %s28
      %s45 = sphi 0, %s29
      %s49 = sphi 0, %s49
      %s51 = sphi 0, %s49
      %s52 = sphi 0, %s51
      %s66 = sphi 0, %s52
      %s70 = sphi 0, %s70
      %s72 = sphi 0, %s70
      %s73 = sphi 0, %s72
      %s87 = sphi 0, %s73
      %s93 = sphi 0, %s95
      %s96 = sphi 0, %s93
      %s97 = sphi 0, %s96
      %s113 = sphi 0, %s97
    $region4: #{tpu_custom_call.1} parent=1 // loop_header_branch
      %18 = sbr.rel (%p16) target = $region8
    $region5: #{tpu_custom_call.1} parent=1 // loop_body
      %s20 = ssub.s32 %s15, 1
      %s21 = ssub.s32 %s15, 2
      %s22 = sadd.s32 %s15, 1
      %s23 = ssub.s32 %s15, %s22
      %p24 = scmp.eq.s32.totalorder %s23, 0
      %s26 = sadd.s32 %s25, 1
      %s27 = scalar_select %p24, %s25, %s26
      %p30 = pneg %p24
      %p31 = scmp.eq.s32.totalorder %s15, 3
      %p32 = por %p30, %p31
      %p33 = scmp.ne.s32.totalorder %s25, %s28
      %p34 = scmp.eq.s32.totalorder %s15, 0
      %p35 = por %p33, %p34
      %p36 = scmp.ne.s32.totalorder %s25, %s28
      %p37 = scmp.eq.s32.totalorder %s20, 3
      %p38 = por %p36, %p37
      %p39 = scmp.ne.s32.totalorder %s28, %s29
      %p40 = scmp.eq.s32.totalorder %s20, 0
      %p41 = por %p39, %p40
      %p42 = scmp.ne.s32.totalorder %s28, %s29
      %p43 = scmp.eq.s32.totalorder %s21, 3
      %p44 = por %p42, %p43
      %p46 = scmp.ne.s32.totalorder %s29, %s45
      %p47 = scmp.eq.s32.totalorder %s21, 0
      %p48 = por %p46, %p47
      %s50 = sadd.s32 %s49, 1
      %p53 = scmp.eq.s32.totalorder %s15, 3
      %p54 = scmp.ne.s32.totalorder %s49, %s51
      %p55 = scmp.eq.s32.totalorder %s15, 0
      %p56 = por %p54, %p55
      %p57 = scmp.ne.s32.totalorder %s49, %s51
      %p58 = scmp.eq.s32.totalorder %s20, 3
      %p59 = por %p57, %p58
      %p60 = scmp.ne.s32.totalorder %s51, %s52
      %p61 = scmp.eq.s32.totalorder %s20, 0
      %p62 = por %p60, %p61
      %p63 = scmp.ne.s32.totalorder %s51, %s52
      %p64 = scmp.eq.s32.totalorder %s21, 3
      %p65 = por %p63, %p64
      %p67 = scmp.ne.s32.totalorder %s52, %s66
      %p68 = scmp.eq.s32.totalorder %s21, 0
      %p69 = por %p67, %p68
      %s71 = sadd.s32 %s70, 1
      %p74 = scmp.eq.s32.totalorder %s15, 3
      %p75 = scmp.ne.s32.totalorder %s70, %s72
      %p76 = scmp.eq.s32.totalorder %s15, 0
      %p77 = por %p75, %p76
      %p78 = scmp.ne.s32.totalorder %s70, %s72
      %p79 = scmp.eq.s32.totalorder %s20, 3
      %p80 = por %p78, %p79
      %p81 = scmp.ne.s32.totalorder %s72, %s73
      %p82 = scmp.eq.s32.totalorder %s20, 0
      %p83 = por %p81, %p82
      %p84 = scmp.ne.s32.totalorder %s72, %s73
      %p85 = scmp.eq.s32.totalorder %s21, 3
      %p86 = por %p84, %p85
      %p88 = scmp.ne.s32.totalorder %s73, %s87
      %p89 = scmp.eq.s32.totalorder %s21, 0
      %p90 = por %p88, %p89
      %s91 = ssub.s32 %s15, %s22
      %p92 = scmp.eq.s32.totalorder %s91, 0
      %s94 = sadd.s32 %s93, 1
      %s95 = scalar_select %p92, %s93, %s94
      %p98 = pneg %p92
      %p99 = scmp.eq.s32.totalorder %s15, 3
      %p100 = por %p98, %p99
      %p101 = scmp.ne.s32.totalorder %s93, %s96
      %p102 = scmp.eq.s32.totalorder %s15, 0
      %p103 = por %p101, %p102
      %p104 = scmp.ne.s32.totalorder %s93, %s96
      %p105 = scmp.eq.s32.totalorder %s20, 3
      %p106 = por %p104, %p105
      %p107 = scmp.ne.s32.totalorder %s96, %s97
      %p108 = scmp.eq.s32.totalorder %s20, 0
      %p109 = por %p107, %p108
      %p110 = scmp.ne.s32.totalorder %s96, %s97
      %p111 = scmp.eq.s32.totalorder %s21, 3
      %p112 = por %p110, %p111
      %p114 = scmp.ne.s32.totalorder %s97, %s113
      %p115 = scmp.eq.s32.totalorder %s21, 0
      %p116 = por %p114, %p115
      %p117 = scmp.le.s32.totalorder 1, %s15
      %p118 = scmp.lt.s32.totalorder %s15, 5
      %p119 = pnand %p117, %p118
      %p120 = pneg %p119
      // Predicated region
      $region9: #{tpu_custom_call.1} parent=5 // pred_check
        _
      $region10: #{tpu_custom_call.1} parent=5 // pred_check_branch
        %122 = sbr.rel (%p119) target = $region12
      $region11: #{tpu_custom_call.1} parent=5 // pred_region
        %s123 = ssub.s32 %s15, 1
        // Predicated region
        $region13: #{tpu_custom_call.1} parent=11 // pred_check
          %p124 = pneg %p62
        $region14: #{tpu_custom_call.1} parent=11 // pred_check_branch
          %126 = sbr.rel (%p124) target = $region16
        $region15: #{tpu_custom_call.1} parent=11 // pred_region
          _
        $region16: #{tpu_custom_call.1} parent=11 // pred_fallthru
          _
        // Predicated region
        $region17: #{tpu_custom_call.1} parent=11 // pred_check
          %p127 = pneg %p83
        $region18: #{tpu_custom_call.1} parent=11 // pred_check_branch
          %129 = sbr.rel (%p127) target = $region20
        $region19: #{tpu_custom_call.1} parent=11 // pred_region
          _
        $region20: #{tpu_custom_call.1} parent=11 // pred_fallthru
          _
      $region12: #{tpu_custom_call.1} parent=5 // pred_fallthru
        _
      %p130 = scmp.lt.s32.totalorder %s15, 4
      // Predicated region
      $region21: #{tpu_custom_call.1} parent=5 // pred_check
        %p131 = pneg %p130
      $region22: #{tpu_custom_call.1} parent=5 // pred_check_branch
        %133 = sbr.rel (%p131) target = $region24
      $region23: #{tpu_custom_call.1} parent=5 // pred_region
        // Predicated region
        $region25: #{tpu_custom_call.1} parent=23 // pred_check
          %p134 = pneg %p35
        $region26: #{tpu_custom_call.1} parent=23 // pred_check_branch
          %136 = sbr.rel (%p134) target = $region28
        $region27: #{tpu_custom_call.1} parent=23 // pred_region
          %s137 = sand.u32 %s25, 1
          %s138 = scalar_lea.sflag [#allocation3], %s137
          %s139 = sand.u32 %s25, 1
          %s140 = smul.addr %s139, 4
          %s141 = scalar_lea.vmem [#allocation2], %s140
          %s143 = ssub.s32 64, 64
          %144 = vsyncadd %s138, %s143
          %s145 = smul.addr %s15, 64
          %s146 = scalar_lea.hbm %s0, %s145
          %s148 = sshll.u32 %s141, 4
          %s149 = int_to_ptr.vmem [resolvable:$true] %s148
          %151 = dma.hbm_to_vmem [thread:$0]  %s146, 64, %s149, %s138
        $region28: #{tpu_custom_call.1} parent=23 // pred_fallthru
          _
      $region24: #{tpu_custom_call.1} parent=5 // pred_fallthru
        _
      %p152 = scmp.le.s32.totalorder 1, %s15
      %p153 = scmp.lt.s32.totalorder %s15, 5
      %p154 = pnand %p152, %p153
      %p155 = pneg %p154
      // Predicated region
      $region29: #{tpu_custom_call.1} parent=5 // pred_check
        _
      $region30: #{tpu_custom_call.1} parent=5 // pred_check_branch
        %157 = sbr.rel (%p154) target = $region32
      $region31: #{tpu_custom_call.1} parent=5 // pred_region
        %s158 = ssub.s32 %s15, 1
        %s159 = sand.u32 %s28, 1
        %s160 = scalar_lea.sflag [#allocation3], %s159
        %s161 = sand.u32 %s28, 1
        %s162 = smul.addr %s161, 4
        %s163 = scalar_lea.vmem [#allocation2], %s162
        // Predicated region
        $region33: #{tpu_custom_call.1} parent=31 // pred_check
          %p164 = pneg %p41
        $region34: #{tpu_custom_call.1} parent=31 // pred_check_branch
          %166 = sbr.rel (%p164) target = $region36
        $region35: #{tpu_custom_call.1} parent=31 // pred_region
          %167 = dma.done %s160, 64
        $region36: #{tpu_custom_call.1} parent=31 // pred_fallthru
          _
        %s168 = sand.u32 %s28, 1
        %s169 = scalar_lea.sflag [#allocation3], %s168
        %s170 = sand.u32 %s28, 1
        %s171 = smul.addr %s170, 4
        %s172 = scalar_lea.vmem [#allocation2], %s171
        %p173 = pneg %p41
        %p174 = pneg %p38
        %p175 = pneg %p62
        %p176 = pneg %p59
        %p177 = pneg %p83
        %p178 = pneg %p80
        %p179 = pneg %p109
        %p180 = pneg %p106
        %s181 = sand.u32 %s96, 1
        %s182 = scalar_lea.sflag [#allocation4], %s181
        %s183 = sand.u32 %s96, 1
        %s184 = smul.addr %s183, 4
        %s185 = scalar_lea.vmem [#allocation5], %s184
        %v186 = vld [vmem:[%s163] sm:$0xf]
        %vm187 = vcmask 1043456
        %v188 = vsel %vm187, %v186, 0.0
        %v189 = vrot.slane %v188, 4
        %v190 = vadd.f32 %v188, %v189
        %v191 = vrot.slane %v190, 2
        %v192 = vadd.f32 %v190, %v191
        %v193 = vrot.slane %v192, 1
        %v194 = vadd.f32 %v192, %v193
        %v195 = vmul.f32 %v186, %v186
        %v196 = vsel %vm187, %v195, 0.0
        %v197 = vrot.slane %v196, 4
        %v198 = vadd.f32 %v196, %v197
        %v199 = vrot.slane %v198, 2
        %v200 = vadd.f32 %v198, %v199
        %v201 = vrot.slane %v200, 1
        %v202 = vadd.f32 %v200, %v201
        %v203 = vmul.f32 %v194, 0.25
        %v204 = vmul.f32 %v202, 0.25
        %v205 = vmul.f32 %v203, %v203
        %v206 = vsub.f32 %v204, %v205
        %v207 = vmax.f32 %v206, 0.0
        %v208 = vadd.f32 %v207, 1e-06
        %v209 = vrsqrt.pop %v208
        %v210 = vsub.f32 %v186, %v203
        %v211 = vmul.f32 %v210, %v209
        %v212 = vld [vmem:[%s1] sm:$0xf]
        %214 = vset.pattern.permute.xlu0 0
        %215 = vperm.xlu0 %214, %v212
        %v216 = vpop.permute.xlu0 %215
        %v218 = vmul.f32 %v216, %v211
        %v219 = vld [vmem:[%s2] sm:$0xf]
        %221 = vset.pattern.permute.xlu0 0
        %222 = vperm.xlu0 %221, %v219
        %v223 = vpop.permute.xlu0 %222
        %v225 = vadd.f32 %v218, %v223
        %226 = vst [vmem:[%s185] sm:$0xf] %v225
        %s227 = sand.u32 %s96, 1
        %s228 = scalar_lea.sflag [#allocation4], %s227
        %s229 = sand.u32 %s96, 1
        %s230 = smul.addr %s229, 4
        %s231 = scalar_lea.vmem [#allocation5], %s230
        // Predicated region
        $region37: #{tpu_custom_call.1} parent=31 // pred_check
          %p232 = pneg %p106
        $region38: #{tpu_custom_call.1} parent=31 // pred_check_branch
          %234 = sbr.rel (%p232) target = $region40
        $region39: #{tpu_custom_call.1} parent=31 // pred_region
          %s236 = ssub.s32 64, 64
          %237 = vsyncadd %s228, %s236
          %s238 = smul.addr %s20, 64
          %s239 = scalar_lea.hbm %s3, %s238
          %s241 = sshll.u32 %s231, 4
          %s242 = int_to_ptr.vmem [resolvable:$true] %s241
          %244 = dma.vmem_to_hbm [thread:$0]  %s242, 64, %s239, %s228
        $region40: #{tpu_custom_call.1} parent=31 // pred_fallthru
          _
      $region32: #{tpu_custom_call.1} parent=5 // pred_fallthru
        _
      %p245 = scmp.le.s32.totalorder 2, %s15
      // Predicated region
      $region41: #{tpu_custom_call.1} parent=5 // pred_check
        %p246 = pneg %p245
      $region42: #{tpu_custom_call.1} parent=5 // pred_check_branch
        %248 = sbr.rel (%p246) target = $region44
      $region43: #{tpu_custom_call.1} parent=5 // pred_region
        %s249 = ssub.s32 %s15, 2
        // Predicated region
        $region45: #{tpu_custom_call.1} parent=43 // pred_check
          %p250 = pneg %p112
        $region46: #{tpu_custom_call.1} parent=43 // pred_check_branch
          %252 = sbr.rel (%p250) target = $region48
        $region47: #{tpu_custom_call.1} parent=43 // pred_region
          %s253 = sand.u32 %s97, 1
          %s254 = scalar_lea.sflag [#allocation4], %s253
          %s255 = sand.u32 %s97, 1
          %s256 = smul.addr %s255, 4
          %s257 = scalar_lea.vmem [#allocation5], %s256
          %258 = dma.done %s254, 64
        $region48: #{tpu_custom_call.1} parent=43 // pred_fallthru
          _
      $region44: #{tpu_custom_call.1} parent=5 // pred_fallthru
        _
    $region6: #{tpu_custom_call.1} parent=1 // loop_footer
      %s19 = sadd.s32 1, %s15
    $region7: #{tpu_custom_call.1} parent=1 // loop_footer_branch
      %14 = sbr.rel target = $region3
    $region8: #{tpu_custom_call.1} parent=1 // loop_exit
      _
    %259 = vsyncpa [#allocation3], 1
    %s260 = scalar_lea.sflag [#allocation3], 1
    %261 = vsyncpa %s260, 1
    %262 = vsyncpa [#allocation4], 1
    %s263 = scalar_lea.sflag [#allocation4], 1
    %264 = vsyncpa %s263, 1

</llo_original>
